<compile_context>
chip_gen: v5e
topology: v5e:2x2
jax: 0.10.0
libtpu: 0.0.40
codegen_flags: <defaults>
</compile_context>

<pallas_src>
import functools

import jax
import jax.numpy as jnp
import numpy as np
from jax.experimental import pallas as pl
from jax.experimental.pallas import tpu as pltpu


def _round_up(x, m):
    return ((x + m - 1) // m) * m


def ce_loss_kernel(logits_ref, target_ref, loss_ref, *, w):
    """logits_ref/target_ref: (TM, C) VMEM tiles; loss_ref: (TM, 1)."""
    logits = logits_ref[...].astype(jnp.float32)              # (TM, C) f32
    tgt = target_ref[...]                                      # native dtype (no extra cast pass)
    tm, c = logits.shape

    col = jax.lax.broadcasted_iota(jnp.int32, (tm, c), 1)      # (TM, C) lane index

    # torch.argmax(target, dim=-1) with first-occurrence tie-break, kept 2-D
    # (max + min-index-of-max), all XLU lane reductions / VPU compares.
    t_max = jnp.max(tgt, axis=-1, keepdims=True)               # (TM, 1)
    idx = jnp.min(jnp.where(tgt == t_max, col, c),
                  axis=-1, keepdims=True)                      # (TM, 1) int32

    # Numerically stable shifted logits.
    m = jnp.max(logits, axis=-1, keepdims=True)                # (TM, 1)
    z = logits - m                                             # (TM, C)
    e = jnp.exp(z)                                             # (TM, C)  EUP

    sum_e = jnp.sum(e, axis=-1, keepdims=True)                 # (TM, 1)  XLU f32 reduce
    sel = jnp.sum(jnp.where(col == idx, z, 0.0),
                  axis=-1, keepdims=True)                      # (TM, 1)  selected shifted logit

    # loss = logsumexp - selected = (m + log(sum_e)) - (m + sel) = log(sum_e) - sel
    loss_ref[...] = (w * (jnp.log(sum_e) - sel)).astype(loss_ref.dtype)


def ce_loss(output, target, w=1.0, tm_cap=8192):
    """output, target: (B, S, C).  Returns the per-element loss, shape (B, S)."""
    assert output.shape == target.shape and output.ndim == 3
    B, S, C = output.shape
    N = B * S

    logits = output.reshape(N, C)          # keep HBM dtype; cast happens in-kernel
    tgt = target.reshape(N, C)

    # --- Row-tile selection (lane-padding-aware, per-generation VMEM budget) ----------
    try:
        info = pltpu.get_tpu_info()
        vmem_cap = int(getattr(info, "vmem_capacity_bytes", 64 * 1024 * 1024))
    except Exception:
        vmem_cap = 64 * 1024 * 1024
    # ~32 MiB scoped limit on v7x (64 MiB physical), ~64 MiB on v5e/v6e (128 MiB physical).
    vmem_limit = min(vmem_cap // 2, 64 * 1024 * 1024)
    budget = (vmem_limit * 3) // 4          # headroom for Mosaic internal scratch

    c_pad = _round_up(C, 128)               # VMEM pads the minor dim to 128 lanes
    in_itemsize = logits.dtype.itemsize + tgt.dtype.itemsize
    # double-buffered inputs (2x) + ~6 live f32/int32 (TM, C) temporaries in the body
    bytes_per_row = c_pad * (2 * in_itemsize + 6 * 4)

    tm = min(int(tm_cap), max(8, budget // bytes_per_row))
    tm = min(tm, _round_up((N + 1) // 2, 8))   # G >= 2 so both v7x TCs get work
    tm = max(8, (tm // 8) * 8)                 # sublane multiple

    G = pl.cdiv(N, tm)                         # final block may be ragged (no wrapper pad)

    cost = pl.CostEstimate(
        flops=8 * N * C,                       # elementwise + lane reductions
        transcendentals=N * C + N,             # exp per element + log per row
        bytes_accessed=N * C * in_itemsize + N * 4,
    )

    loss = pl.pallas_call(
        functools.partial(ce_loss_kernel, w=float(w)),
        out_shape=jax.ShapeDtypeStruct((N, 1), jnp.float32),
        grid_spec=pltpu.PrefetchScalarGridSpec(
            num_scalar_prefetch=0,
            grid=(G,),
            in_specs=[
                pl.BlockSpec((tm, C), lambda i: (i, 0)),
                pl.BlockSpec((tm, C), lambda i: (i, 0)),
            ],
            out_specs=pl.BlockSpec((tm, 1), lambda i: (i, 0)),
        ),
        compiler_params=pltpu.CompilerParams(
            dimension_semantics=("parallel",),
            vmem_limit_bytes=vmem_limit,
        ),
        cost_estimate=cost,
    )(logits, tgt)

    return loss.reshape(B, S)


def ce_loss_ref(output, target, w=1.0):
    # pure-JAX reference matching w * F.cross_entropy(..., reduction='none')
    idx = jnp.argmax(target, axis=-1)
    logp = jax.nn.log_softmax(output.astype(jnp.float32), axis=-1)
    picked = jnp.take_along_axis(logp, idx[..., None], axis=-1)[..., 0]
    return w * (-picked)


if __name__ == "__main__":
    key = jax.random.PRNGKey(0)
    k1, k2, k3, k4 = jax.random.split(key, 4)

    # Small shape consistent with the module: batch=2, seq=8, classes=32.
    B, S, C = 2, 8, 32
    output = jax.random.normal(k1, (B, S, C), dtype=jnp.float32)
    target = jax.random.normal(k2, (B, S, C), dtype=jnp.float32)   # soft scores; argmax'd in-kernel

    loss = ce_loss(output, target, w=1.0)
    jax.block_until_ready(loss)
    np.testing.assert_allclose(np.asarray(loss),
                               np.asarray(ce_loss_ref(output, target, w=1.0)),
                               rtol=1e-5, atol=1e-5)

    # Second check: multi-step "parallel" grid, large row tile, and the ragged final
    # block path (N = 4*1999 = 7996 rows, tm = 4000 -> G = 2, last block 3996 valid rows).
    B2, S2, C2 = 4, 1999, 32
    output2 = jax.random.normal(k3, (B2, S2, C2), dtype=jnp.float32)
    target2 = jax.random.normal(k4, (B2, S2, C2), dtype=jnp.float32)
    loss2 = ce_loss(output2, target2, w=0.5)
    jax.block_until_ready(loss2)
    np.testing.assert_allclose(np.asarray(loss2),
                               np.asarray(ce_loss_ref(output2, target2, w=0.5)),
                               rtol=1e-5, atol=1e-5)

    print("KERNEL_OK")
</pallas_src>

<mosaic_0001>
module attributes {stable_mosaic.version = 11 : i64} {
  func.func @ce_loss_kernel(%arg0: i32, %arg1: memref<8x32xf32, #tpu.memory_space<vmem>>, %arg2: memref<8x32xf32, #tpu.memory_space<vmem>>, %arg3: memref<8x1xf32, #tpu.memory_space<vmem>>) attributes {dimension_semantics = [#tpu.dimension_semantics<parallel>], iteration_bounds = array<i64: 2>, scalar_prefetch = 0 : i64, scratch_operands = 0 : i64, tpu.core_type = #tpu.core_type<tc>, window_params = [{transform_indices = @transform_0, window_bounds = array<i64: 8, 32>}, {transform_indices = @transform_1, window_bounds = array<i64: 8, 32>}, {transform_indices = @transform_2, window_bounds = array<i64: 8, 1>}]} {
    %c0 = arith.constant 0 : index
    %c0_0 = arith.constant 0 : index
    %0 = vector.load %arg1[%c0, %c0_0] : memref<8x32xf32, #tpu.memory_space<vmem>>, vector<8x32xf32>
    %c0_1 = arith.constant 0 : index
    %c0_2 = arith.constant 0 : index
    %1 = vector.load %arg2[%c0_1, %c0_2] : memref<8x32xf32, #tpu.memory_space<vmem>>, vector<8x32xf32>
    %2 = tpu.iota {dimensions = array<i32: 1>} : vector<8x32xi32>
    %cst = arith.constant dense<0xFF800000> : vector<8xf32>
    %3 = vector.multi_reduction <maximumf>, %1, %cst [1] : vector<8x32xf32> to vector<8xf32>
    %4 = vector.shape_cast %3 : vector<8xf32> to vector<8x1xf32>
    %5 = vector.broadcast %4 : vector<8x1xf32> to vector<8x32xf32>
    %6 = arith.cmpf oeq, %1, %5 : vector<8x32xf32>
    %c32_i32 = arith.constant 32 : i32
    %7 = vector.broadcast %c32_i32 : i32 to vector<8x32xi32>
    %8 = arith.select %6, %2, %7 : vector<8x32xi1>, vector<8x32xi32>
    %cst_3 = arith.constant dense<2147483647> : vector<8xi32>
    %9 = vector.multi_reduction <minsi>, %8, %cst_3 [1] : vector<8x32xi32> to vector<8xi32>
    %10 = vector.shape_cast %9 : vector<8xi32> to vector<8x1xi32>
    %cst_4 = arith.constant dense<0xFF800000> : vector<8xf32>
    %11 = vector.multi_reduction <maximumf>, %0, %cst_4 [1] : vector<8x32xf32> to vector<8xf32>
    %12 = vector.shape_cast %11 : vector<8xf32> to vector<8x1xf32>
    %13 = vector.broadcast %12 : vector<8x1xf32> to vector<8x32xf32>
    %14 = arith.subf %0, %13 : vector<8x32xf32>
    %15 = math.exp %14 : vector<8x32xf32>
    %cst_5 = arith.constant dense<0.000000e+00> : vector<8xf32>
    %16 = vector.multi_reduction <add>, %15, %cst_5 [1] : vector<8x32xf32> to vector<8xf32>
    %17 = vector.shape_cast %16 : vector<8xf32> to vector<8x1xf32>
    %18 = vector.broadcast %10 : vector<8x1xi32> to vector<8x32xi32>
    %19 = arith.cmpi eq, %2, %18 : vector<8x32xi32>
    %cst_6 = arith.constant 0.000000e+00 : f32
    %20 = vector.broadcast %cst_6 : f32 to vector<8x32xf32>
    %21 = arith.select %19, %14, %20 : vector<8x32xi1>, vector<8x32xf32>
    %cst_7 = arith.constant dense<0.000000e+00> : vector<8xf32>
    %22 = vector.multi_reduction <add>, %21, %cst_7 [1] : vector<8x32xf32> to vector<8xf32>
    %23 = vector.shape_cast %22 : vector<8xf32> to vector<8x1xf32>
    %24 = math.log %17 : vector<8x1xf32>
    %25 = arith.subf %24, %23 : vector<8x1xf32>
    %cst_8 = arith.constant 1.000000e+00 : f32
    %26 = vector.broadcast %cst_8 : f32 to vector<8x1xf32>
    %27 = arith.mulf %26, %25 : vector<8x1xf32>
    %c0_9 = arith.constant 0 : index
    %c0_10 = arith.constant 0 : index
    %28 = vector.load %arg3[%c0_9, %c0_10] : memref<8x1xf32, #tpu.memory_space<vmem>>, vector<8x1xf32>
    tpu.vector_store %arg3[%c0_9, %c0_10], %27 {strides = array<i32>} : memref<8x1xf32, #tpu.memory_space<vmem>>, vector<8x1xf32>,
    return
  }
  func.func @transform_0(%arg0: i32) -> (i32, i32) {
    %c0_i32 = arith.constant 0 : i32
    %c0_i32_0 = arith.constant 0 : i32
    return %arg0, %c0_i32 : i32, i32
  }
  func.func @transform_1(%arg0: i32) -> (i32, i32) {
    %c0_i32 = arith.constant 0 : i32
    %c0_i32_0 = arith.constant 0 : i32
    return %arg0, %c0_i32 : i32, i32
  }
  func.func @transform_2(%arg0: i32) -> (i32, i32) {
    %c0_i32 = arith.constant 0 : i32
    %c0_i32_0 = arith.constant 0 : i32
    return %arg0, %c0_i32 : i32, i32
  }
}

</mosaic_0001>

<llo_original>
// kernel: tpu_custom_call.1
$region0: #{tpu_custom_call.1}
  #allocation0 [shape = 'u32[]', space=smem, size = 0x4, offset = 0x4, fixed_abs, tag = 'smem constant byte address 0x4 - core index']
  #allocation1 [shape = 'u32[72,128]{1,0:T(1,128)}', space=vmem, size = 0x9000, scoped, tag = 'internal scratch']
  %s0 = inlined_call_operand.hbm [shape: f32[16,32], index: 0, kind: input, shape index: {}]
  %s1 = inlined_call_operand.hbm [shape: f32[16,32], index: 1, kind: input, shape index: {}]
  %s2 = inlined_call_operand.vmem [shape: f32[16,1], index: 2, kind: output, shape index: {}]
  %s3 = sld [smem:[#allocation0]]
  $region49: #{tpu_custom_call.1} parent=0
    _
  %s5 = ssub.s32 1, %s3
  %s6 = scalar_select 0, %s5, %s3
  $region1: #{tpu_custom_call.1} parent=0
    #allocation2 [shape = 'u8[8192]{0}', space=vmem, size = 0x2000, scoped, tag = 'input window, operand 0']
    #allocation3 [shape = 's32[2]{0}', space=sflag, size = 0x8, scoped, tag = 'scoped memory for tpu_custom_call.1']
    #allocation4 [shape = 'u8[8192]{0}', space=vmem, size = 0x2000, scoped, tag = 'input window, operand 1']
    #allocation5 [shape = 's32[2]{0}', space=sflag, size = 0x8, scoped, tag = 'scoped memory for tpu_custom_call.1']
    %7 = vsyncpa [#allocation3], 0
    %s8 = scalar_lea.sflag [#allocation3], 1
    %9 = vsyncpa %s8, 0
    %10 = vsyncpa [#allocation5], 0
    %s11 = scalar_lea.sflag [#allocation5], 1
    %12 = vsyncpa %s11, 0
    loop: start=0, step=1, limit=4
    $region2: #{tpu_custom_call.1} parent=1 // loop_pre_header
      _
    $region3: #{tpu_custom_call.1} parent=1 // loop_header
      %s14 = sphi 0, %s18
      %p15 = scmp.ge.s32.totalorder %s14, 4
      %s24 = sphi 0, %s26
      %s27 = sphi 0, %s24
      %s28 = sphi 0, %s27
      %s44 = sphi 0, %s28
      %s50 = sphi 0, %s52
      %s53 = sphi 0, %s50
      %s54 = sphi 0, %s53
      %s70 = sphi 0, %s54
      %s76 = sphi 0, %s78
      %s79 = sphi 0, %s76
      %s80 = sphi 0, %s79
      %s96 = sphi 0, %s80
    $region4: #{tpu_custom_call.1} parent=1 // loop_header_branch
      %17 = sbr.rel (%p15) target = $region8
    $region5: #{tpu_custom_call.1} parent=1 // loop_body
      %s19 = ssub.s32 %s14, 1
      %s20 = ssub.s32 %s14, 2
      %s21 = sadd.s32 %s14, 1
      %s22 = ssub.s32 %s14, %s21
      %p23 = scmp.eq.s32.totalorder %s22, 0
      %s25 = sadd.s32 %s24, 1
      %s26 = scalar_select %p23, %s24, %s25
      %p29 = pneg %p23
      %p30 = scmp.eq.s32.totalorder %s14, 1
      %p31 = por %p29, %p30
      %p32 = scmp.ne.s32.totalorder %s24, %s27
      %p33 = scmp.eq.s32.totalorder %s14, 0
      %p34 = por %p32, %p33
      %p35 = scmp.ne.s32.totalorder %s24, %s27
      %p36 = scmp.eq.s32.totalorder %s19, 1
      %p37 = por %p35, %p36
      %p38 = scmp.ne.s32.totalorder %s27, %s28
      %p39 = scmp.eq.s32.totalorder %s19, 0
      %p40 = por %p38, %p39
      %p41 = scmp.ne.s32.totalorder %s27, %s28
      %p42 = scmp.eq.s32.totalorder %s20, 1
      %p43 = por %p41, %p42
      %p45 = scmp.ne.s32.totalorder %s28, %s44
      %p46 = scmp.eq.s32.totalorder %s20, 0
      %p47 = por %p45, %p46
      %s48 = ssub.s32 %s14, %s21
      %p49 = scmp.eq.s32.totalorder %s48, 0
      %s51 = sadd.s32 %s50, 1
      %s52 = scalar_select %p49, %s50, %s51
      %p55 = pneg %p49
      %p56 = scmp.eq.s32.totalorder %s14, 1
      %p57 = por %p55, %p56
      %p58 = scmp.ne.s32.totalorder %s50, %s53
      %p59 = scmp.eq.s32.totalorder %s14, 0
      %p60 = por %p58, %p59
      %p61 = scmp.ne.s32.totalorder %s50, %s53
      %p62 = scmp.eq.s32.totalorder %s19, 1
      %p63 = por %p61, %p62
      %p64 = scmp.ne.s32.totalorder %s53, %s54
      %p65 = scmp.eq.s32.totalorder %s19, 0
      %p66 = por %p64, %p65
      %p67 = scmp.ne.s32.totalorder %s53, %s54
      %p68 = scmp.eq.s32.totalorder %s20, 1
      %p69 = por %p67, %p68
      %p71 = scmp.ne.s32.totalorder %s54, %s70
      %p72 = scmp.eq.s32.totalorder %s20, 0
      %p73 = por %p71, %p72
      %s74 = ssub.s32 %s14, %s21
      %p75 = scmp.eq.s32.totalorder %s74, 0
      %s77 = sadd.s32 %s76, 1
      %s78 = scalar_select %p75, %s76, %s77
      %p81 = pneg %p75
      %p82 = scmp.eq.s32.totalorder %s14, 1
      %p83 = por %p81, %p82
      %p84 = scmp.ne.s32.totalorder %s76, %s79
      %p85 = scmp.eq.s32.totalorder %s14, 0
      %p86 = por %p84, %p85
      %p87 = scmp.ne.s32.totalorder %s76, %s79
      %p88 = scmp.eq.s32.totalorder %s19, 1
      %p89 = por %p87, %p88
      %p90 = scmp.ne.s32.totalorder %s79, %s80
      %p91 = scmp.eq.s32.totalorder %s19, 0
      %p92 = por %p90, %p91
      %p93 = scmp.ne.s32.totalorder %s79, %s80
      %p94 = scmp.eq.s32.totalorder %s20, 1
      %p95 = por %p93, %p94
      %p97 = scmp.ne.s32.totalorder %s80, %s96
      %p98 = scmp.eq.s32.totalorder %s20, 0
      %p99 = por %p97, %p98
      %p100 = scmp.le.s32.totalorder 1, %s14
      %p101 = scmp.lt.s32.totalorder %s14, 3
      %p102 = pnand %p100, %p101
      %p103 = pneg %p102
      // Predicated region
      $region9: #{tpu_custom_call.1} parent=5 // pred_check
        _
      $region10: #{tpu_custom_call.1} parent=5 // pred_check_branch
        %105 = sbr.rel (%p102) target = $region12
      $region11: #{tpu_custom_call.1} parent=5 // pred_region
        %s106 = ssub.s32 %s14, 1
      $region12: #{tpu_custom_call.1} parent=5 // pred_fallthru
        _
      %p107 = scmp.lt.s32.totalorder %s14, 2
      // Predicated region
      $region13: #{tpu_custom_call.1} parent=5 // pred_check
        %p108 = pneg %p107
      $region14: #{tpu_custom_call.1} parent=5 // pred_check_branch
        %110 = sbr.rel (%p108) target = $region16
      $region15: #{tpu_custom_call.1} parent=5 // pred_region
        // Predicated region
        $region17: #{tpu_custom_call.1} parent=15 // pred_check
          %p111 = pneg %p34
        $region18: #{tpu_custom_call.1} parent=15 // pred_check_branch
          %113 = sbr.rel (%p111) target = $region20
        $region19: #{tpu_custom_call.1} parent=15 // pred_region
          %s114 = sand.u32 %s24, 1
          %s115 = scalar_lea.sflag [#allocation3], %s114
          %s116 = sand.u32 %s24, 1
          %s117 = smul.addr %s116, 8
          %s118 = scalar_lea.vmem [#allocation2], %s117
          %120 = vsyncadd %s115, 0
          %s121 = smul.addr %s14, 8
          %s122 = scalar_lea.hbm %s0, %s121
          %s124 = sshll.u32 %s122, 4
          %s125 = int_to_ptr.hbm [resolvable:$true] %s124
          %s126 = sshll.u32 %s118, 4
          %s127 = int_to_ptr.vmem [resolvable:$true] %s126
          %129 = dma.hbm_to_vmem [thread:$0]  %s125, 128, %s127, %s115
        $region20: #{tpu_custom_call.1} parent=15 // pred_fallthru
          _
        // Predicated region
        $region21: #{tpu_custom_call.1} parent=15 // pred_check
          %p130 = pneg %p60
        $region22: #{tpu_custom_call.1} parent=15 // pred_check_branch
          %132 = sbr.rel (%p130) target = $region24
        $region23: #{tpu_custom_call.1} parent=15 // pred_region
          %s133 = sand.u32 %s50, 1
          %s134 = scalar_lea.sflag [#allocation5], %s133
          %s135 = sand.u32 %s50, 1
          %s136 = smul.addr %s135, 8
          %s137 = scalar_lea.vmem [#allocation4], %s136
          %139 = vsyncadd %s134, 0
          %s140 = smul.addr %s14, 8
          %s141 = scalar_lea.hbm %s1, %s140
          %s143 = sshll.u32 %s141, 4
          %s144 = int_to_ptr.hbm [resolvable:$true] %s143
          %s145 = sshll.u32 %s137, 4
          %s146 = int_to_ptr.vmem [resolvable:$true] %s145
          %148 = dma.hbm_to_vmem [thread:$0]  %s144, 128, %s146, %s134
        $region24: #{tpu_custom_call.1} parent=15 // pred_fallthru
          _
      $region16: #{tpu_custom_call.1} parent=5 // pred_fallthru
        _
      %p149 = scmp.le.s32.totalorder 1, %s14
      %p150 = scmp.lt.s32.totalorder %s14, 3
      %p151 = pnand %p149, %p150
      %p152 = pneg %p151
      // Predicated region
      $region25: #{tpu_custom_call.1} parent=5 // pred_check
        _
      $region26: #{tpu_custom_call.1} parent=5 // pred_check_branch
        %154 = sbr.rel (%p151) target = $region28
      $region27: #{tpu_custom_call.1} parent=5 // pred_region
        %s155 = ssub.s32 %s14, 1
        %s156 = sand.u32 %s27, 1
        %s157 = scalar_lea.sflag [#allocation3], %s156
        %s158 = sand.u32 %s27, 1
        %s159 = smul.addr %s158, 8
        %s160 = scalar_lea.vmem [#allocation2], %s159
        // Predicated region
        $region29: #{tpu_custom_call.1} parent=27 // pred_check
          %p161 = pneg %p40
        $region30: #{tpu_custom_call.1} parent=27 // pred_check_branch
          %163 = sbr.rel (%p161) target = $region32
        $region31: #{tpu_custom_call.1} parent=27 // pred_region
          %165 = dma.done %s157, 128
        $region32: #{tpu_custom_call.1} parent=27 // pred_fallthru
          _
        %s166 = sand.u32 %s53, 1
        %s167 = scalar_lea.sflag [#allocation5], %s166
        %s168 = sand.u32 %s53, 1
        %s169 = smul.addr %s168, 8
        %s170 = scalar_lea.vmem [#allocation4], %s169
        // Predicated region
        $region33: #{tpu_custom_call.1} parent=27 // pred_check
          %p171 = pneg %p66
        $region34: #{tpu_custom_call.1} parent=27 // pred_check_branch
          %173 = sbr.rel (%p171) target = $region36
        $region35: #{tpu_custom_call.1} parent=27 // pred_region
          %175 = dma.done %s167, 128
        $region36: #{tpu_custom_call.1} parent=27 // pred_fallthru
          _
        %s176 = sand.u32 %s27, 1
        %s177 = scalar_lea.sflag [#allocation3], %s176
        %s178 = sand.u32 %s27, 1
        %s179 = smul.addr %s178, 8
        %s180 = scalar_lea.vmem [#allocation2], %s179
        %p181 = pneg %p40
        %p182 = pneg %p37
        %s183 = sand.u32 %s53, 1
        %s184 = scalar_lea.sflag [#allocation5], %s183
        %s185 = sand.u32 %s53, 1
        %s186 = smul.addr %s185, 8
        %s187 = scalar_lea.vmem [#allocation4], %s186
        %p188 = pneg %p66
        %p189 = pneg %p63
        %p190 = pneg %p92
        %p191 = pneg %p89
        %p192 = scmp.lt.s32.totalorder %s19, 1
        %s193 = scalar_select %p192, %s19, 1
        %s194 = smul.addr %s193, 8
        %s195 = scalar_lea.vmem %s2, %s194
        %p196 = scmp.lt.s32.totalorder %s19, 1
        %s197 = scalar_select %p196, %s19, 1
        %s198 = smul.addr %s197, 8
        %s199 = scalar_lea.vmem %s2, %s198
        %v200 = vld [vmem:[%s160] sm:$0xff]
        %v201 = vld [vmem:[%s170] sm:$0xff]
        %v202 = vlaneseq
        %v203 = vand.u32 %v202, 127
        %vm204 = vcmask 261120
        %v205 = vsel %vm204, %v201, -inf
        %206 = vmax.xlane.f32.xlu0 %v205
        %v207 = vpop.xlane.xlu0 %206
        %vm208 = vcmp.eq.f32.partialorder %v201, %v207
        %v209 = vsel %vm208, %v203, 32
        %v210 = vsel %vm204, %v209, 2147483647
        %v211 = vand.u32 %v210, 65535
        %v212 = vshra.s32 %v210, 16
        %v213 = vcvt.s32.f32 %v211
        %v214 = vcvt.s32.f32 %v212
        %215 = vmin.xlane.f32.xlu0 %v214
        %v216 = vpop.xlane.xlu0 %215
        %vm217 = vcmp.eq.f32.partialorder %v214, %v216
        %v218 = vsel %vm217, %v213, inf
        %219 = vmin.xlane.f32.xlu0 %v218
        %v220 = vpop.xlane.xlu0 %219
        %v221 = vcvt.f32.s32 %v220
        %v222 = vcvt.f32.s32 %v216
        %v223 = vshll.u32 %v222, 16
        %v224 = vadd.s32 %v223, %v221
        %v225 = vsel %vm204, %v200, -inf
        %226 = vmax.xlane.f32.xlu0 %v225
        %v227 = vpop.xlane.xlu0 %226
        %v228 = vsub.f32 %v200, %v227
        %v229 = vmul.f32 %v228, 1.442695
        %v230 = vpow.pop %v229
        %v231 = vsel %vm204, %v230, 0.0
        %232 = vadd.xlane.f32.xlu0 %v231
        %v233 = vpop.xlane.xlu0 %232
        %vm234 = vcmp.eq.s32.totalorder %v203, %v224
        %v235 = vsel %vm234, %v228, 0.0
        %v236 = vsel %vm204, %v235, 0.0
        %237 = vadd.xlane.f32.xlu0 %v236
        %v238 = vpop.xlane.xlu0 %237
        %v239 = vlog2.pop %v233
        %v240 = vmul.f32 %v239, 0.6931472
        %v241 = vsub.f32 %v240, %v238
        %vm242 = vcmask 7168
        %243 = vst.msk [vmem:[%s199] sm:$0xff] %vm242, %v241
        %p244 = scmp.lt.s32.totalorder %s19, 1
        %s245 = scalar_select %p244, %s19, 1
        %s246 = smul.addr %s245, 8
        %s247 = scalar_lea.vmem %s2, %s246
        // Predicated region
        $region37: #{tpu_custom_call.1} parent=27 // pred_check
          %p248 = pneg %p89
        $region38: #{tpu_custom_call.1} parent=27 // pred_check_branch
          %250 = sbr.rel (%p248) target = $region40
        $region39: #{tpu_custom_call.1} parent=27 // pred_region
          _
        $region40: #{tpu_custom_call.1} parent=27 // pred_fallthru
          _
      $region28: #{tpu_custom_call.1} parent=5 // pred_fallthru
        _
      %p251 = scmp.le.s32.totalorder 2, %s14
      // Predicated region
      $region41: #{tpu_custom_call.1} parent=5 // pred_check
        %p252 = pneg %p251
      $region42: #{tpu_custom_call.1} parent=5 // pred_check_branch
        %254 = sbr.rel (%p252) target = $region44
      $region43: #{tpu_custom_call.1} parent=5 // pred_region
        %s255 = ssub.s32 %s14, 2
        // Predicated region
        $region45: #{tpu_custom_call.1} parent=43 // pred_check
          %p256 = pneg %p95
        $region46: #{tpu_custom_call.1} parent=43 // pred_check_branch
          %258 = sbr.rel (%p256) target = $region48
        $region47: #{tpu_custom_call.1} parent=43 // pred_region
          %p259 = scmp.lt.s32.totalorder %s20, 1
          %s260 = scalar_select %p259, %s20, 1
          %s261 = smul.addr %s260, 8
          %s262 = scalar_lea.vmem %s2, %s261
        $region48: #{tpu_custom_call.1} parent=43 // pred_fallthru
          _
      $region44: #{tpu_custom_call.1} parent=5 // pred_fallthru
        _
    $region6: #{tpu_custom_call.1} parent=1 // loop_footer
      %s18 = sadd.s32 1, %s14
    $region7: #{tpu_custom_call.1} parent=1 // loop_footer_branch
      %13 = sbr.rel target = $region3
    $region8: #{tpu_custom_call.1} parent=1 // loop_exit
      _
    %263 = vsyncpa [#allocation3], 1
    %s264 = scalar_lea.sflag [#allocation3], 1
    %265 = vsyncpa %s264, 1
    %266 = vsyncpa [#allocation5], 1
    %s267 = scalar_lea.sflag [#allocation5], 1
    %268 = vsyncpa %s267, 1

</llo_original>
